<compile_context>
chip_gen: v7x
topology: tpu7x:2x2x1
jax: 0.10.0
libtpu: 0.0.40
codegen_flags: <defaults>
</compile_context>

<pallas_src>
import functools

import jax
import jax.numpy as jnp
from jax.experimental import pallas as pl
from jax.experimental.pallas import tpu as pltpu


def _round_up(x, m):
    return -(-x // m) * m


# -----------------------------------------------------------------------------
# Fused kernel: teacher channel attention + attention-weighted squared error,
# accumulated into a resident lane-dense (1, C, tile_q) block per parallel
# chunk.  Inputs arrive as (Bs, C, tile_q): lane axis = queries (128-multiple).
# -----------------------------------------------------------------------------
def _decoder_fea_loss_kernel(xs_ref, xt_ref, out_ref, *, inv_temp, inv_c):
    # Zero the resident accumulator block at the start of each inner sweep.
    @pl.when(pl.program_id(1) == 0)
    def _():
        out_ref[...] = jnp.zeros_like(out_ref)

    xt = xt_ref[...].astype(jnp.float32)      # (Bs, C, tile_q)
    xs = xs_ref[...].astype(jnp.float32)

    # Teacher channel attention (without the constant Q factor, folded into the
    # wrapper epilogue):  softmax over the BATCH axis of mean_C(|pred_T|)/temp.
    cmap = jnp.sum(jnp.abs(xt), axis=1, keepdims=True) * (inv_c * inv_temp)
    cmap = cmap - jnp.max(cmap, axis=0, keepdims=True)          # (Bs, 1, tq)
    e = jnp.exp(cmap)
    denom = jnp.sum(e, axis=0, keepdims=True)                   # (1, 1, tq)
    attn = e * pl.reciprocal(denom, approx=False)               # (Bs, 1, tq)

    # Folded MSE numerator: A * (s - t)^2   (A >= 0).
    d = xs - xt
    w = (d * d) * attn                                          # (Bs, C, tq)

    # Sum over the Bs slabs = pure elementwise VALU adds; lane-dense store.
    out_ref[...] += jnp.sum(w, axis=0, keepdims=True)           # (1, C, tq)


def _pick_tile_q(Q, Bs, C, num_parallel,
                 vmem_budget_bytes=32 * 1024 * 1024):
    """Largest 128-multiple Q-tile whose double-buffered tiles fit the budget."""
    q_pad = _round_up(Q, 128)
    bytes_per_q = Bs * _round_up(C, 8) * 4        # padded (Bs, C, 1) column, f32
    # 2 streaming inputs x 2 pipeline buffers.
    t = (vmem_budget_bytes // (4 * bytes_per_q)) // 128 * 128
    t = max(128, min(int(t), q_pad))
    if num_parallel > 1:
        # Make sure every TensorCore gets at least one tile.
        t = min(t, max(128, _round_up(-(-q_pad // num_parallel), 128)))
    q_pad = _round_up(q_pad, t)
    return t, q_pad


def decoder_feature_loss(pred_S, pred_T, gt_bboxes=None, gt_labels=None,
                         img_metas=None, *, temp=0.5, ratio=0.5,
                         num_parallel=1):
    """pred_S, pred_T: (querys, Bs, C). Returns scalar loss (float32)."""
    Q, Bs, C = pred_S.shape

    num_parallel = max(1, int(num_parallel))
    tile_q, q_pad = _pick_tile_q(Q, Bs, C, num_parallel)
    n_tiles = q_pad // tile_q
    if n_tiles % num_parallel:
        num_parallel = 1                          # still correct everywhere
    n_inner = n_tiles // num_parallel

    # Layout plumbing: lane axis = queries (128-multiple), zero-padded.
    xs = jnp.transpose(pred_S, (1, 2, 0))         # (Bs, C, Q)
    xt = jnp.transpose(pred_T, (1, 2, 0))
    if q_pad != Q:
        pad = ((0, 0), (0, 0), (0, q_pad - Q))
        xs = jnp.pad(xs, pad)
        xt = jnp.pad(xt, pad)                     # zero rows contribute 0

    kern = functools.partial(_decoder_fea_loss_kernel,
                             inv_temp=1.0 / float(temp),
                             inv_c=1.0 / float(C))

    # Inputs: (Bs, C, tile_q) blocks, tiled along the lane (query) axis only.
    x_spec = pl.BlockSpec(
        (Bs, C, tile_q),
        lambda p, i, n_inner=n_inner: (0, 0, p * n_inner + i))
    # Output: one resident lane-dense accumulator block per parallel chunk.
    out_spec = pl.BlockSpec((1, C, tile_q), lambda p, i: (p, 0, 0))

    partials = pl.pallas_call(
        kern,
        out_shape=jax.ShapeDtypeStruct((num_parallel, C, tile_q), jnp.float32),
        grid_spec=pltpu.PrefetchScalarGridSpec(
            num_scalar_prefetch=0,
            grid=(num_parallel, n_inner),
            in_specs=[x_spec, x_spec],
            out_specs=out_spec,
        ),
        compiler_params=pltpu.CompilerParams(
            dimension_semantics=("parallel", "arbitrary"),
            vmem_limit_bytes=48 * 1024 * 1024,    # safe on v7x (64 MiB physical)
        ),
    )(xs, xt)

    # Epilogue: tiny reduction; Q*softmax scale cancels the 1/Q of the mean,
    # so the combined constant is ratio / (Bs * C).
    return jnp.sum(partials) * (float(ratio) / float(Bs * C))


# -----------------------------------------------------------------------------
# Pure-JAX reference mirroring the PyTorch module (sqrt form, no folding).
# -----------------------------------------------------------------------------
def reference_loss(pred_S, pred_T, *, temp=0.5, ratio=0.5):
    Q, Bs, C = pred_S.shape
    value = jnp.abs(pred_T)
    channel_map = jnp.mean(value, axis=2)                     # (Q, Bs)
    A_T = Q * jax.nn.softmax(channel_map / temp, axis=1)      # softmax over batch
    A_T = A_T[:, :, None]                                     # (Q, Bs, 1)
    fea_s = pred_S * jnp.sqrt(A_T)
    fea_t = pred_T * jnp.sqrt(A_T)
    return jnp.mean((fea_s - fea_t) ** 2) * ratio


if __name__ == "__main__":
    # Small decoder-feature shapes: (num_queries, batch, channels).
    Q, Bs, C = 512, 2, 32
    temp, ratio = 0.5, 0.5

    key = jax.random.PRNGKey(0)
    k1, k2 = jax.random.split(key)
    pred_S = jax.random.normal(k1, (Q, Bs, C), dtype=jnp.float32)
    pred_T = jax.random.normal(k2, (Q, Bs, C), dtype=jnp.float32)

    # forward() accepts these but never uses them; pass deterministic dummies.
    gt_bboxes = [jnp.array([[8., 12., 60., 72.]], dtype=jnp.float32)] * Bs
    gt_labels = [jnp.array([1], dtype=jnp.int32)] * Bs
    img_metas = [{"img_shape": (128, 128, 3)}] * Bs

    loss = decoder_feature_loss(pred_S, pred_T, gt_bboxes, gt_labels, img_metas,
                                temp=temp, ratio=ratio)
    loss = jax.block_until_ready(loss)

    ref = jax.block_until_ready(reference_loss(pred_S, pred_T,
                                               temp=temp, ratio=ratio))
    assert jnp.allclose(loss, ref, rtol=1e-4, atol=1e-4), (loss, ref)
    print("KERNEL_OK")
</pallas_src>

<mosaic_0001>
module attributes {stable_mosaic.version = 11 : i64} {
  func.func @_decoder_fea_loss_kernel(%arg0: i32, %arg1: i32, %arg2: memref<2x32x512xf32, #tpu.memory_space<vmem>>, %arg3: memref<2x32x512xf32, #tpu.memory_space<vmem>>, %arg4: memref<1x32x512xf32, #tpu.memory_space<vmem>>) attributes {dimension_semantics = [#tpu.dimension_semantics<parallel>, #tpu.dimension_semantics<arbitrary>], iteration_bounds = array<i64: 1, 1>, scalar_prefetch = 0 : i64, scratch_operands = 0 : i64, tpu.core_type = #tpu.core_type<tc>, window_params = [{transform_indices = @transform_0, window_bounds = array<i64: 2, 32, 512>}, {transform_indices = @transform_1, window_bounds = array<i64: 2, 32, 512>}, {transform_indices = @transform_2, window_bounds = array<i64: 1, 32, 512>}]} {
    %c0_i32 = arith.constant 0 : i32
    %0 = arith.cmpi eq, %arg1, %c0_i32 : i32
    %1 = arith.extui %0 : i1 to i32
    %c0_i32_0 = arith.constant 0 : i32
    %2 = arith.cmpi ne, %1, %c0_i32_0 : i32
    scf.if %2 {
      %cst_16 = arith.constant 0.000000e+00 : f32
      %29 = vector.broadcast %cst_16 : f32 to vector<1x32x512xf32>
      %c0_17 = arith.constant 0 : index
      %c0_18 = arith.constant 0 : index
      %c0_19 = arith.constant 0 : index
      %30 = vector.load %arg4[%c0_17, %c0_18, %c0_19] : memref<1x32x512xf32, #tpu.memory_space<vmem>>, vector<1x32x512xf32>
      tpu.vector_store %arg4[%c0_17, %c0_18, %c0_19], %29 {strides = array<i32>} : memref<1x32x512xf32, #tpu.memory_space<vmem>>, vector<1x32x512xf32>,
    } else {
    }
    %c0 = arith.constant 0 : index
    %c0_1 = arith.constant 0 : index
    %c0_2 = arith.constant 0 : index
    %3 = vector.load %arg3[%c0, %c0_1, %c0_2] : memref<2x32x512xf32, #tpu.memory_space<vmem>>, vector<2x32x512xf32>
    %c0_3 = arith.constant 0 : index
    %c0_4 = arith.constant 0 : index
    %c0_5 = arith.constant 0 : index
    %4 = vector.load %arg2[%c0_3, %c0_4, %c0_5] : memref<2x32x512xf32, #tpu.memory_space<vmem>>, vector<2x32x512xf32>
    %5 = math.absf %3 : vector<2x32x512xf32>
    %cst = arith.constant dense<0.000000e+00> : vector<2x512xf32>
    %6 = vector.multi_reduction <add>, %5, %cst [1] : vector<2x32x512xf32> to vector<2x512xf32>
    %7 = vector.shape_cast %6 : vector<2x512xf32> to vector<2x1x512xf32>
    %cst_6 = arith.constant 6.250000e-02 : f32
    %8 = vector.broadcast %cst_6 : f32 to vector<2x1x512xf32>
    %9 = arith.mulf %7, %8 : vector<2x1x512xf32>
    %cst_7 = arith.constant dense<0xFF800000> : vector<1x512xf32>
    %10 = vector.multi_reduction <maximumf>, %9, %cst_7 [0] : vector<2x1x512xf32> to vector<1x512xf32>
    %11 = vector.shape_cast %10 : vector<1x512xf32> to vector<1x1x512xf32>
    %12 = vector.broadcast %11 : vector<1x1x512xf32> to vector<2x1x512xf32>
    %13 = arith.subf %9, %12 : vector<2x1x512xf32>
    %14 = math.exp %13 : vector<2x1x512xf32>
    %cst_8 = arith.constant dense<0.000000e+00> : vector<1x512xf32>
    %15 = vector.multi_reduction <add>, %14, %cst_8 [0] : vector<2x1x512xf32> to vector<1x512xf32>
    %16 = vector.shape_cast %15 : vector<1x512xf32> to vector<1x1x512xf32>
    %17 = tpu.reciprocal %16 : vector<1x1x512xf32> -> vector<1x1x512xf32>
    %18 = vector.broadcast %17 : vector<1x1x512xf32> to vector<2x1x512xf32>
    %19 = arith.mulf %14, %18 : vector<2x1x512xf32>
    %20 = arith.subf %4, %3 : vector<2x32x512xf32>
    %21 = arith.mulf %20, %20 : vector<2x32x512xf32>
    %22 = vector.broadcast %19 : vector<2x1x512xf32> to vector<2x32x512xf32>
    %23 = arith.mulf %21, %22 : vector<2x32x512xf32>
    %c0_9 = arith.constant 0 : index
    %c0_10 = arith.constant 0 : index
    %c0_11 = arith.constant 0 : index
    %24 = vector.load %arg4[%c0_9, %c0_10, %c0_11] : memref<1x32x512xf32, #tpu.memory_space<vmem>>, vector<1x32x512xf32>
    %cst_12 = arith.constant dense<0.000000e+00> : vector<32x512xf32>
    %25 = vector.multi_reduction <add>, %23, %cst_12 [0] : vector<2x32x512xf32> to vector<32x512xf32>
    %26 = vector.shape_cast %25 : vector<32x512xf32> to vector<1x32x512xf32>
    %27 = arith.addf %24, %26 : vector<1x32x512xf32>
    %c0_13 = arith.constant 0 : index
    %c0_14 = arith.constant 0 : index
    %c0_15 = arith.constant 0 : index
    %28 = vector.load %arg4[%c0_13, %c0_14, %c0_15] : memref<1x32x512xf32, #tpu.memory_space<vmem>>, vector<1x32x512xf32>
    tpu.vector_store %arg4[%c0_13, %c0_14, %c0_15], %27 {strides = array<i32>} : memref<1x32x512xf32, #tpu.memory_space<vmem>>, vector<1x32x512xf32>,
    return
  }
  func.func @transform_0(%arg0: i32, %arg1: i32) -> (i32, i32, i32) {
    %c1_i32 = arith.constant 1 : i32
    %0 = arith.muli %arg0, %c1_i32 : i32
    %1 = arith.addi %0, %arg1 : i32
    %c0_i32 = arith.constant 0 : i32
    %c0_i32_0 = arith.constant 0 : i32
    %c0_i32_1 = arith.constant 0 : i32
    return %c0_i32, %c0_i32_0, %1 : i32, i32, i32
  }
  func.func @transform_1(%arg0: i32, %arg1: i32) -> (i32, i32, i32) {
    %c1_i32 = arith.constant 1 : i32
    %0 = arith.muli %arg0, %c1_i32 : i32
    %1 = arith.addi %0, %arg1 : i32
    %c0_i32 = arith.constant 0 : i32
    %c0_i32_0 = arith.constant 0 : i32
    %c0_i32_1 = arith.constant 0 : i32
    return %c0_i32, %c0_i32_0, %1 : i32, i32, i32
  }
  func.func @transform_2(%arg0: i32, %arg1: i32) -> (i32, i32, i32) {
    %c0_i32 = arith.constant 0 : i32
    %c0_i32_0 = arith.constant 0 : i32
    %c0_i32_1 = arith.constant 0 : i32
    return %arg0, %c0_i32, %c0_i32_0 : i32, i32, i32
  }
}

</mosaic_0001>

<llo_original>
// kernel: tpu_custom_call.1
$region0: #{tpu_custom_call.1}
  #allocation0 [shape = 'u32[]', space=smem, size = 0x4, offset = 0x4, fixed_abs, tag = 'smem constant byte address 0x4 - core index']
  #allocation1 [shape = 'u32[144,128]{1,0:T(1,128)}', space=vmem, size = 0x12000, scoped, tag = 'internal scratch']
  %s0 = inlined_call_operand.hbm [shape: f32[2,32,512], index: 0, kind: input, shape index: {}]
  %s1 = inlined_call_operand.hbm [shape: f32[2,32,512], index: 1, kind: input, shape index: {}]
  %s2 = inlined_call_operand.hbm [shape: f32[1,32,512], index: 2, kind: output, shape index: {}]
  %s3 = sld [smem:[#allocation0]]
  $region30: #{tpu_custom_call.1} parent=0
    _
  %s5 = ssub.s32 1, %s3
  %s6 = scalar_select 0, %s5, %s3
  $region1: #{tpu_custom_call.1} parent=0
    #allocation2 [shape = 'u8[131072]{0}', space=vmem, size = 0x20000, scoped, tag = 'input window, operand 0, single buffered']
    #allocation3 [shape = 's32[1]{0}', space=sflag, size = 0x4, scoped, tag = 'scoped memory for tpu_custom_call.1']
    #allocation4 [shape = 's32[1]{0}', space=sflag, size = 0x4, scoped, tag = 'scoped memory for tpu_custom_call.1']
    #allocation5 [shape = 'u8[131072]{0}', space=vmem, size = 0x20000, scoped, tag = 'input window, operand 1, single buffered']
    #allocation6 [shape = 's32[1]{0}', space=sflag, size = 0x4, scoped, tag = 'scoped memory for tpu_custom_call.1']
    #allocation7 [shape = 'u8[65536]{0}', space=vmem, size = 0x10000, scoped, tag = 'output window, operand 0, single buffered']
    %7 = vsyncpa [#allocation3], 0
    %8 = vsyncpa [#allocation6], 0
    %9 = vsyncpa [#allocation4], 0
    // Predicated region
    $region2: #{tpu_custom_call.1} parent=1 // pred_check
      _
    $region3: #{tpu_custom_call.1} parent=1 // pred_check_branch
      %11 = sbr.rel (0) target = $region5
    $region4: #{tpu_custom_call.1} parent=1 // pred_region
      %s12 = sadd.s32 0, 0
      %s13 = smul.u32 4, %s12
      %s15 = ssub.s32 4096, 4096
      %16 = vsyncadd [#allocation3], %s15
      %s17 = smul.addr %s13, 128
      %s18 = scalar_lea.hbm %s0, %s17
      %s19 = sshll.u32 [#allocation2], 4
      %s20 = int_to_ptr.vmem [resolvable:$true] %s19
      %25 = dma.hbm_to_vmem [thread:$0]  %s18, 4096, %s20, [#allocation3], 512, 512, 32
    $region5: #{tpu_custom_call.1} parent=1 // pred_fallthru
      _
    // Predicated region
    $region6: #{tpu_custom_call.1} parent=1 // pred_check
      _
    $region7: #{tpu_custom_call.1} parent=1 // pred_check_branch
      %27 = sbr.rel (0) target = $region9
    $region8: #{tpu_custom_call.1} parent=1 // pred_region
      %s28 = sadd.s32 0, 0
      %s29 = smul.u32 4, %s28
      %s31 = ssub.s32 4096, 4096
      %32 = vsyncadd [#allocation6], %s31
      %s33 = smul.addr %s29, 128
      %s34 = scalar_lea.hbm %s1, %s33
      %s35 = sshll.u32 [#allocation5], 4
      %s36 = int_to_ptr.vmem [resolvable:$true] %s35
      %41 = dma.hbm_to_vmem [thread:$0]  %s34, 4096, %s36, [#allocation6], 512, 512, 32
    $region9: #{tpu_custom_call.1} parent=1 // pred_fallthru
      _
    // Predicated region
    $region10: #{tpu_custom_call.1} parent=1 // pred_check
      _
    $region11: #{tpu_custom_call.1} parent=1 // pred_check_branch
      %43 = sbr.rel (0) target = $region13
    $region12: #{tpu_custom_call.1} parent=1 // pred_region
      %44 = dma.done [#allocation3], 4096
    $region13: #{tpu_custom_call.1} parent=1 // pred_fallthru
      _
    // Predicated region
    $region14: #{tpu_custom_call.1} parent=1 // pred_check
      _
    $region15: #{tpu_custom_call.1} parent=1 // pred_check_branch
      %46 = sbr.rel (0) target = $region17
    $region16: #{tpu_custom_call.1} parent=1 // pred_region
      %47 = dma.done [#allocation6], 4096
    $region17: #{tpu_custom_call.1} parent=1 // pred_fallthru
      _
    %s48 = sadd.s32 0, 0
    %s49 = smul.u32 4, %s48
    %s50 = sadd.s32 0, 0
    %s51 = smul.u32 4, %s50
    %p52 = scmp.eq.s32.totalorder 0, 0
    // Predicated region
    $region18: #{tpu_custom_call.1} parent=1 // pred_check
      %p53 = pneg %p52
    $region19: #{tpu_custom_call.1} parent=1 // pred_check_branch
      %55 = sbr.rel (%p53) target = $region21
    $region20: #{tpu_custom_call.1} parent=1 // pred_region
      %56 = vst [vmem:[#allocation7] sm:$0xff] 0.0
      %57 = vst [vmem:[#allocation7 + $0x8] sm:$0xff] 0.0
      %58 = vst [vmem:[#allocation7 + $0x10] sm:$0xff] 0.0
      %59 = vst [vmem:[#allocation7 + $0x18] sm:$0xff] 0.0
      %60 = vst [vmem:[#allocation7 + $0x20] sm:$0xff] 0.0
      %61 = vst [vmem:[#allocation7 + $0x28] sm:$0xff] 0.0
      %62 = vst [vmem:[#allocation7 + $0x30] sm:$0xff] 0.0
      %63 = vst [vmem:[#allocation7 + $0x38] sm:$0xff] 0.0
      %64 = vst [vmem:[#allocation7 + $0x40] sm:$0xff] 0.0
      %65 = vst [vmem:[#allocation7 + $0x48] sm:$0xff] 0.0
      %66 = vst [vmem:[#allocation7 + $0x50] sm:$0xff] 0.0
      %67 = vst [vmem:[#allocation7 + $0x58] sm:$0xff] 0.0
      %68 = vst [vmem:[#allocation7 + $0x60] sm:$0xff] 0.0
      %69 = vst [vmem:[#allocation7 + $0x68] sm:$0xff] 0.0
      %70 = vst [vmem:[#allocation7 + $0x70] sm:$0xff] 0.0
      %71 = vst [vmem:[#allocation7 + $0x78] sm:$0xff] 0.0
    $region21: #{tpu_custom_call.1} parent=1 // pred_fallthru
      _
    %v72 = vld [vmem:[#allocation5] sm:$0xff]
    %v73 = vld [vmem:[#allocation5 + $0x8] sm:$0xff]
    %v74 = vld [vmem:[#allocation5 + $0x10] sm:$0xff]
    %v75 = vld [vmem:[#allocation5 + $0x18] sm:$0xff]
    %v76 = vld [vmem:[#allocation5 + $0x20] sm:$0xff]
    %v77 = vld [vmem:[#allocation5 + $0x28] sm:$0xff]
    %v78 = vld [vmem:[#allocation5 + $0x30] sm:$0xff]
    %v79 = vld [vmem:[#allocation5 + $0x38] sm:$0xff]
    %v80 = vld [vmem:[#allocation5 + $0x40] sm:$0xff]
    %v81 = vld [vmem:[#allocation5 + $0x48] sm:$0xff]
    %v82 = vld [vmem:[#allocation5 + $0x50] sm:$0xff]
    %v83 = vld [vmem:[#allocation5 + $0x58] sm:$0xff]
    %v84 = vld [vmem:[#allocation5 + $0x60] sm:$0xff]
    %v85 = vld [vmem:[#allocation5 + $0x68] sm:$0xff]
    %v86 = vld [vmem:[#allocation5 + $0x70] sm:$0xff]
    %v87 = vld [vmem:[#allocation5 + $0x78] sm:$0xff]
    %v88 = vld [vmem:[#allocation5 + $0x80] sm:$0xff]
    %v89 = vld [vmem:[#allocation5 + $0x88] sm:$0xff]
    %v90 = vld [vmem:[#allocation5 + $0x90] sm:$0xff]
    %v91 = vld [vmem:[#allocation5 + $0x98] sm:$0xff]
    %v92 = vld [vmem:[#allocation5 + $0xa0] sm:$0xff]
    %v93 = vld [vmem:[#allocation5 + $0xa8] sm:$0xff]
    %v94 = vld [vmem:[#allocation5 + $0xb0] sm:$0xff]
    %v95 = vld [vmem:[#allocation5 + $0xb8] sm:$0xff]
    %v96 = vld [vmem:[#allocation5 + $0xc0] sm:$0xff]
    %v97 = vld [vmem:[#allocation5 + $0xc8] sm:$0xff]
    %v98 = vld [vmem:[#allocation5 + $0xd0] sm:$0xff]
    %v99 = vld [vmem:[#allocation5 + $0xd8] sm:$0xff]
    %v100 = vld [vmem:[#allocation5 + $0xe0] sm:$0xff]
    %v101 = vld [vmem:[#allocation5 + $0xe8] sm:$0xff]
    %v102 = vld [vmem:[#allocation5 + $0xf0] sm:$0xff]
    %v103 = vld [vmem:[#allocation5 + $0xf8] sm:$0xff]
    %v104 = vld [vmem:[#allocation2] sm:$0xff]
    %v105 = vld [vmem:[#allocation2 + $0x8] sm:$0xff]
    %v106 = vld [vmem:[#allocation2 + $0x10] sm:$0xff]
    %v107 = vld [vmem:[#allocation2 + $0x18] sm:$0xff]
    %v108 = vld [vmem:[#allocation2 + $0x20] sm:$0xff]
    %v109 = vld [vmem:[#allocation2 + $0x28] sm:$0xff]
    %v110 = vld [vmem:[#allocation2 + $0x30] sm:$0xff]
    %v111 = vld [vmem:[#allocation2 + $0x38] sm:$0xff]
    %v112 = vld [vmem:[#allocation2 + $0x40] sm:$0xff]
    %v113 = vld [vmem:[#allocation2 + $0x48] sm:$0xff]
    %v114 = vld [vmem:[#allocation2 + $0x50] sm:$0xff]
    %v115 = vld [vmem:[#allocation2 + $0x58] sm:$0xff]
    %v116 = vld [vmem:[#allocation2 + $0x60] sm:$0xff]
    %v117 = vld [vmem:[#allocation2 + $0x68] sm:$0xff]
    %v118 = vld [vmem:[#allocation2 + $0x70] sm:$0xff]
    %v119 = vld [vmem:[#allocation2 + $0x78] sm:$0xff]
    %v120 = vld [vmem:[#allocation2 + $0x80] sm:$0xff]
    %v121 = vld [vmem:[#allocation2 + $0x88] sm:$0xff]
    %v122 = vld [vmem:[#allocation2 + $0x90] sm:$0xff]
    %v123 = vld [vmem:[#allocation2 + $0x98] sm:$0xff]
    %v124 = vld [vmem:[#allocation2 + $0xa0] sm:$0xff]
    %v125 = vld [vmem:[#allocation2 + $0xa8] sm:$0xff]
    %v126 = vld [vmem:[#allocation2 + $0xb0] sm:$0xff]
    %v127 = vld [vmem:[#allocation2 + $0xb8] sm:$0xff]
    %v128 = vld [vmem:[#allocation2 + $0xc0] sm:$0xff]
    %v129 = vld [vmem:[#allocation2 + $0xc8] sm:$0xff]
    %v130 = vld [vmem:[#allocation2 + $0xd0] sm:$0xff]
    %v131 = vld [vmem:[#allocation2 + $0xd8] sm:$0xff]
    %v132 = vld [vmem:[#allocation2 + $0xe0] sm:$0xff]
    %v133 = vld [vmem:[#allocation2 + $0xe8] sm:$0xff]
    %v134 = vld [vmem:[#allocation2 + $0xf0] sm:$0xff]
    %v135 = vld [vmem:[#allocation2 + $0xf8] sm:$0xff]
    %v136 = vand.u32 2147483647, %v72
    %v137 = vand.u32 2147483647, %v73
    %v138 = vand.u32 2147483647, %v74
    %v139 = vand.u32 2147483647, %v75
    %v140 = vand.u32 2147483647, %v76
    %v141 = vand.u32 2147483647, %v77
    %v142 = vand.u32 2147483647, %v78
    %v143 = vand.u32 2147483647, %v79
    %v144 = vand.u32 2147483647, %v80
    %v145 = vand.u32 2147483647, %v81
    %v146 = vand.u32 2147483647, %v82
    %v147 = vand.u32 2147483647, %v83
    %v148 = vand.u32 2147483647, %v84
    %v149 = vand.u32 2147483647, %v85
    %v150 = vand.u32 2147483647, %v86
    %v151 = vand.u32 2147483647, %v87
    %v152 = vand.u32 2147483647, %v88
    %v153 = vand.u32 2147483647, %v89
    %v154 = vand.u32 2147483647, %v90
    %v155 = vand.u32 2147483647, %v91
    %v156 = vand.u32 2147483647, %v92
    %v157 = vand.u32 2147483647, %v93
    %v158 = vand.u32 2147483647, %v94
    %v159 = vand.u32 2147483647, %v95
    %v160 = vand.u32 2147483647, %v96
    %v161 = vand.u32 2147483647, %v97
    %v162 = vand.u32 2147483647, %v98
    %v163 = vand.u32 2147483647, %v99
    %v164 = vand.u32 2147483647, %v100
    %v165 = vand.u32 2147483647, %v101
    %v166 = vand.u32 2147483647, %v102
    %v167 = vand.u32 2147483647, %v103
    %v168 = vadd.f32 %v136, %v140
    %v169 = vadd.f32 %v168, %v144
    %v170 = vadd.f32 %v169, %v148
    %v171 = vrot.slane %v170, 4
    %v172 = vadd.f32 %v170, %v171
    %v173 = vrot.slane %v172, 2
    %v174 = vadd.f32 %v172, %v173
    %v175 = vrot.slane %v174, 1
    %v176 = vadd.f32 %v174, %v175
    %v177 = vadd.f32 %v137, %v141
    %v178 = vadd.f32 %v177, %v145
    %v179 = vadd.f32 %v178, %v149
    %v180 = vrot.slane %v179, 4
    %v181 = vadd.f32 %v179, %v180
    %v182 = vrot.slane %v181, 2
    %v183 = vadd.f32 %v181, %v182
    %v184 = vrot.slane %v183, 1
    %v185 = vadd.f32 %v183, %v184
    %v186 = vadd.f32 %v138, %v142
    %v187 = vadd.f32 %v186, %v146
    %v188 = vadd.f32 %v187, %v150
    %v189 = vrot.slane %v188, 4
    %v190 = vadd.f32 %v188, %v189
    %v191 = vrot.slane %v190, 2
    %v192 = vadd.f32 %v190, %v191
    %v193 = vrot.slane %v192, 1
    %v194 = vadd.f32 %v192, %v193
    %v195 = vadd.f32 %v139, %v143
    %v196 = vadd.f32 %v195, %v147
    %v197 = vadd.f32 %v196, %v151
    %v198 = vrot.slane %v197, 4
    %v199 = vadd.f32 %v197, %v198
    %v200 = vrot.slane %v199, 2
    %v201 = vadd.f32 %v199, %v200
    %v202 = vrot.slane %v201, 1
    %v203 = vadd.f32 %v201, %v202
    %v204 = vadd.f32 %v152, %v156
    %v205 = vadd.f32 %v204, %v160
    %v206 = vadd.f32 %v205, %v164
    %v207 = vrot.slane %v206, 4
    %v208 = vadd.f32 %v206, %v207
    %v209 = vrot.slane %v208, 2
    %v210 = vadd.f32 %v208, %v209
    %v211 = vrot.slane %v210, 1
    %v212 = vadd.f32 %v210, %v211
    %v213 = vadd.f32 %v153, %v157
    %v214 = vadd.f32 %v213, %v161
    %v215 = vadd.f32 %v214, %v165
    %v216 = vrot.slane %v215, 4
    %v217 = vadd.f32 %v215, %v216
    %v218 = vrot.slane %v217, 2
    %v219 = vadd.f32 %v217, %v218
    %v220 = vrot.slane %v219, 1
    %v221 = vadd.f32 %v219, %v220
    %v222 = vadd.f32 %v154, %v158
    %v223 = vadd.f32 %v222, %v162
    %v224 = vadd.f32 %v223, %v166
    %v225 = vrot.slane %v224, 4
    %v226 = vadd.f32 %v224, %v225
    %v227 = vrot.slane %v226, 2
    %v228 = vadd.f32 %v226, %v227
    %v229 = vrot.slane %v228, 1
    %v230 = vadd.f32 %v228, %v229
    %v231 = vadd.f32 %v155, %v159
    %v232 = vadd.f32 %v231, %v163
    %v233 = vadd.f32 %v232, %v167
    %v234 = vrot.slane %v233, 4
    %v235 = vadd.f32 %v233, %v234
    %v236 = vrot.slane %v235, 2
    %v237 = vadd.f32 %v235, %v236
    %v238 = vrot.slane %v237, 1
    %v239 = vadd.f32 %v237, %v238
    %v240 = vmul.f32 %v176, 0.0625
    %v241 = vmul.f32 %v185, 0.0625
    %v242 = vmul.f32 %v194, 0.0625
    %v243 = vmul.f32 %v203, 0.0625
    %v244 = vmul.f32 %v212, 0.0625
    %v245 = vmul.f32 %v221, 0.0625
    %v246 = vmul.f32 %v230, 0.0625
    %v247 = vmul.f32 %v239, 0.0625
    %v248 = vmax.f32 %v240, %v244
    %v249 = vmax.f32 %v241, %v245
    %v250 = vmax.f32 %v242, %v246
    %v251 = vmax.f32 %v243, %v247
    %v252 = vsub.f32 %v240, %v248
    %v253 = vsub.f32 %v241, %v249
    %v254 = vsub.f32 %v242, %v250
    %v255 = vsub.f32 %v243, %v251
    %v256 = vsub.f32 %v244, %v248
    %v257 = vsub.f32 %v245, %v249
    %v258 = vsub.f32 %v246, %v250
    %v259 = vsub.f32 %v247, %v251
    %v260 = vmul.f32 %v252, 1.442695
    %v261 = vpow.pop %v260
    %v262 = vmul.f32 %v253, 1.442695
    %v263 = vpow.pop %v262
    %v264 = vmul.f32 %v254, 1.442695
    %v265 = vpow.pop %v264
    %v266 = vmul.f32 %v255, 1.442695
    %v267 = vpow.pop %v266
    %v268 = vmul.f32 %v256, 1.442695
    %v269 = vpow.pop %v268
    %v270 = vmul.f32 %v257, 1.442695
    %v271 = vpow.pop %v270
    %v272 = vmul.f32 %v258, 1.442695
    %v273 = vpow.pop %v272
    %v274 = vmul.f32 %v259, 1.442695
    %v275 = vpow.pop %v274
    %v276 = vadd.f32 %v261, %v269
    %v277 = vadd.f32 %v263, %v271
    %v278 = vadd.f32 %v265, %v273
    %v279 = vadd.f32 %v267, %v275
    %v280 = vrcp.pop %v276
    %v281 = vrcp.pop %v277
    %v282 = vrcp.pop %v278
    %v283 = vrcp.pop %v279
    %v284 = vmul.f32 %v261, %v280
    %v285 = vmul.f32 %v263, %v281
    %v286 = vmul.f32 %v265, %v282
    %v287 = vmul.f32 %v267, %v283
    %v288 = vmul.f32 %v269, %v280
    %v289 = vmul.f32 %v271, %v281
    %v290 = vmul.f32 %v273, %v282
    %v291 = vmul.f32 %v275, %v283
    %v292 = vsub.f32 %v104, %v72
    %v293 = vsub.f32 %v105, %v73
    %v294 = vsub.f32 %v106, %v74
    %v295 = vsub.f32 %v107, %v75
    %v296 = vsub.f32 %v108, %v76
    %v297 = vsub.f32 %v109, %v77
    %v298 = vsub.f32 %v110, %v78
    %v299 = vsub.f32 %v111, %v79
    %v300 = vsub.f32 %v112, %v80
    %v301 = vsub.f32 %v113, %v81
    %v302 = vsub.f32 %v114, %v82
    %v303 = vsub.f32 %v115, %v83
    %v304 = vsub.f32 %v116, %v84
    %v305 = vsub.f32 %v117, %v85
    %v306 = vsub.f32 %v118, %v86
    %v307 = vsub.f32 %v119, %v87
    %v308 = vsub.f32 %v120, %v88
    %v309 = vsub.f32 %v121, %v89
    %v310 = vsub.f32 %v122, %v90
    %v311 = vsub.f32 %v123, %v91
    %v312 = vsub.f32 %v124, %v92
    %v313 = vsub.f32 %v125, %v93
    %v314 = vsub.f32 %v126, %v94
    %v315 = vsub.f32 %v127, %v95
    %v316 = vsub.f32 %v128, %v96
    %v317 = vsub.f32 %v129, %v97
    %v318 = vsub.f32 %v130, %v98
    %v319 = vsub.f32 %v131, %v99
    %v320 = vsub.f32 %v132, %v100
    %v321 = vsub.f32 %v133, %v101
    %v322 = vsub.f32 %v134, %v102
    %v323 = vsub.f32 %v135, %v103
    %v324 = vmul.f32 %v292, %v292
    %v325 = vmul.f32 %v293, %v293
    %v326 = vmul.f32 %v294, %v294
    %v327 = vmul.f32 %v295, %v295
    %v328 = vmul.f32 %v296, %v296
    %v329 = vmul.f32 %v297, %v297
    %v330 = vmul.f32 %v298, %v298
    %v331 = vmul.f32 %v299, %v299
    %v332 = vmul.f32 %v300, %v300
    %v333 = vmul.f32 %v301, %v301
    %v334 = vmul.f32 %v302, %v302
    %v335 = vmul.f32 %v303, %v303
    %v336 = vmul.f32 %v304, %v304
    %v337 = vmul.f32 %v305, %v305
    %v338 = vmul.f32 %v306, %v306
    %v339 = vmul.f32 %v307, %v307
    %v340 = vmul.f32 %v308, %v308
    %v341 = vmul.f32 %v309, %v309
    %v342 = vmul.f32 %v310, %v310
    %v343 = vmul.f32 %v311, %v311
    %v344 = vmul.f32 %v312, %v312
    %v345 = vmul.f32 %v313, %v313
    %v346 = vmul.f32 %v314, %v314
    %v347 = vmul.f32 %v315, %v315
    %v348 = vmul.f32 %v316, %v316
    %v349 = vmul.f32 %v317, %v317
    %v350 = vmul.f32 %v318, %v318
    %v351 = vmul.f32 %v319, %v319
    %v352 = vmul.f32 %v320, %v320
    %v353 = vmul.f32 %v321, %v321
    %v354 = vmul.f32 %v322, %v322
    %v355 = vmul.f32 %v323, %v323
    %v356 = vmul.f32 %v324, %v284
    %v357 = vmul.f32 %v325, %v285
    %v358 = vmul.f32 %v326, %v286
    %v359 = vmul.f32 %v327, %v287
    %v360 = vmul.f32 %v328, %v284
    %v361 = vmul.f32 %v329, %v285
    %v362 = vmul.f32 %v330, %v286
    %v363 = vmul.f32 %v331, %v287
    %v364 = vmul.f32 %v332, %v284
    %v365 = vmul.f32 %v333, %v285
    %v366 = vmul.f32 %v334, %v286
    %v367 = vmul.f32 %v335, %v287
    %v368 = vmul.f32 %v336, %v284
    %v369 = vmul.f32 %v337, %v285
    %v370 = vmul.f32 %v338, %v286
    %v371 = vmul.f32 %v339, %v287
    %v372 = vmul.f32 %v340, %v288
    %v373 = vmul.f32 %v341, %v289
    %v374 = vmul.f32 %v342, %v290
    %v375 = vmul.f32 %v343, %v291
    %v376 = vmul.f32 %v344, %v288
    %v377 = vmul.f32 %v345, %v289
    %v378 = vmul.f32 %v346, %v290
    %v379 = vmul.f32 %v347, %v291
    %v380 = vmul.f32 %v348, %v288
    %v381 = vmul.f32 %v349, %v289
    %v382 = vmul.f32 %v350, %v290
    %v383 = vmul.f32 %v351, %v291
    %v384 = vmul.f32 %v352, %v288
    %v385 = vmul.f32 %v353, %v289
    %v386 = vmul.f32 %v354, %v290
    %v387 = vmul.f32 %v355, %v291
    %v388 = vld [vmem:[#allocation7] sm:$0xff]
    %v389 = vld [vmem:[#allocation7 + $0x8] sm:$0xff]
    %v390 = vld [vmem:[#allocation7 + $0x10] sm:$0xff]
    %v391 = vld [vmem:[#allocation7 + $0x18] sm:$0xff]
    %v392 = vld [vmem:[#allocation7 + $0x20] sm:$0xff]
    %v393 = vld [vmem:[#allocation7 + $0x28] sm:$0xff]
    %v394 = vld [vmem:[#allocation7 + $0x30] sm:$0xff]
    %v395 = vld [vmem:[#allocation7 + $0x38] sm:$0xff]
    %v396 = vld [vmem:[#allocation7 + $0x40] sm:$0xff]
    %v397 = vld [vmem:[#allocation7 + $0x48] sm:$0xff]
    %v398 = vld [vmem:[#allocation7 + $0x50] sm:$0xff]
    %v399 = vld [vmem:[#allocation7 + $0x58] sm:$0xff]
    %v400 = vld [vmem:[#allocation7 + $0x60] sm:$0xff]
    %v401 = vld [vmem:[#allocation7 + $0x68] sm:$0xff]
    %v402 = vld [vmem:[#allocation7 + $0x70] sm:$0xff]
    %v403 = vld [vmem:[#allocation7 + $0x78] sm:$0xff]
    %v404 = vadd.f32 %v356, %v372
    %v405 = vadd.f32 %v357, %v373
    %v406 = vadd.f32 %v358, %v374
    %v407 = vadd.f32 %v359, %v375
    %v408 = vadd.f32 %v360, %v376
    %v409 = vadd.f32 %v361, %v377
    %v410 = vadd.f32 %v362, %v378
    %v411 = vadd.f32 %v363, %v379
    %v412 = vadd.f32 %v364, %v380
    %v413 = vadd.f32 %v365, %v381
    %v414 = vadd.f32 %v366, %v382
    %v415 = vadd.f32 %v367, %v383
    %v416 = vadd.f32 %v368, %v384
    %v417 = vadd.f32 %v369, %v385
    %v418 = vadd.f32 %v370, %v386
    %v419 = vadd.f32 %v371, %v387
    %v420 = vadd.f32 %v388, %v404
    %v421 = vadd.f32 %v389, %v405
    %v422 = vadd.f32 %v390, %v406
    %v423 = vadd.f32 %v391, %v407
    %v424 = vadd.f32 %v392, %v408
    %v425 = vadd.f32 %v393, %v409
    %v426 = vadd.f32 %v394, %v410
    %v427 = vadd.f32 %v395, %v411
    %v428 = vadd.f32 %v396, %v412
    %v429 = vadd.f32 %v397, %v413
    %v430 = vadd.f32 %v398, %v414
    %v431 = vadd.f32 %v399, %v415
    %v432 = vadd.f32 %v400, %v416
    %v433 = vadd.f32 %v401, %v417
    %v434 = vadd.f32 %v402, %v418
    %v435 = vadd.f32 %v403, %v419
    %436 = vst [vmem:[#allocation7] sm:$0xff] %v420
    %437 = vst [vmem:[#allocation7 + $0x8] sm:$0xff] %v421
    %438 = vst [vmem:[#allocation7 + $0x10] sm:$0xff] %v422
    %439 = vst [vmem:[#allocation7 + $0x18] sm:$0xff] %v423
    %440 = vst [vmem:[#allocation7 + $0x20] sm:$0xff] %v424
    %441 = vst [vmem:[#allocation7 + $0x28] sm:$0xff] %v425
    %442 = vst [vmem:[#allocation7 + $0x30] sm:$0xff] %v426
    %443 = vst [vmem:[#allocation7 + $0x38] sm:$0xff] %v427
    %444 = vst [vmem:[#allocation7 + $0x40] sm:$0xff] %v428
    %445 = vst [vmem:[#allocation7 + $0x48] sm:$0xff] %v429
    %446 = vst [vmem:[#allocation7 + $0x50] sm:$0xff] %v430
    %447 = vst [vmem:[#allocation7 + $0x58] sm:$0xff] %v431
    %448 = vst [vmem:[#allocation7 + $0x60] sm:$0xff] %v432
    %449 = vst [vmem:[#allocation7 + $0x68] sm:$0xff] %v433
    %450 = vst [vmem:[#allocation7 + $0x70] sm:$0xff] %v434
    %451 = vst [vmem:[#allocation7 + $0x78] sm:$0xff] %v435
    // Predicated region
    $region22: #{tpu_custom_call.1} parent=1 // pred_check
      _
    $region23: #{tpu_custom_call.1} parent=1 // pred_check_branch
      %453 = sbr.rel (0) target = $region25
    $region24: #{tpu_custom_call.1} parent=1 // pred_region
      %s455 = ssub.s32 2048, 2048
      %456 = vsyncadd [#allocation4], %s455
      %s457 = sshll.u32 [#allocation7], 4
      %s458 = int_to_ptr.vmem [resolvable:$true] %s457
      %463 = dma.vmem_to_hbm [thread:$0]  %s458, 2048, %s2, [#allocation4], 512, 512, 32
    $region25: #{tpu_custom_call.1} parent=1 // pred_fallthru
      _
    // Predicated region
    $region26: #{tpu_custom_call.1} parent=1 // pred_check
      _
    $region27: #{tpu_custom_call.1} parent=1 // pred_check_branch
      %465 = sbr.rel (0) target = $region29
    $region28: #{tpu_custom_call.1} parent=1 // pred_region
      %466 = dma.done [#allocation4], 2048
    $region29: #{tpu_custom_call.1} parent=1 // pred_fallthru
      _
    %467 = vsyncpa [#allocation3], 1
    %468 = vsyncpa [#allocation6], 1
    %469 = vsyncpa [#allocation4], 1

</llo_original>
